<compile_context>
chip_gen: v7x
topology: tpu7x:2x2x1
jax: 0.10.0
libtpu: 0.0.40
codegen_flags: <defaults>
</compile_context>

<pallas_src>
import functools

import jax
import jax.numpy as jnp
from jax.experimental import pallas as pl
from jax.experimental.pallas import tpu as pltpu

_MAX_ROW_TILE = 1024                 # rows per block (multiple of 8)
_MAX_BLOCK_BYTES = 2 * 1024 * 1024   # per-operand f32 block cap (v5e-safe)
_LANE_WIDTHS = (512, 256, 128)       # preferred lane-dense widths


def _pick_row_tile(n_rows, n_cols, row_tile=None):
    """Largest row tile: full array if it fits, else a multiple of 8 under the cap.

    `row_tile` (must be a multiple of 8) overrides the heuristic, mainly for
    exercising the multi-step / masked paths at small test sizes.
    """
    if row_tile is not None:
        return n_rows if n_rows <= row_tile else row_tile
    by_bytes = max(8, ((_MAX_BLOCK_BYTES // (4 * n_cols)) // 8) * 8)
    cap = min(_MAX_ROW_TILE, by_bytes)
    return n_rows if n_rows <= cap else cap


def _to_2d(x):
    """Pure reshape (no pad) to a 2-D layout, lane-dense (cols % 128 == 0) if possible."""
    flat = x.reshape(-1)
    total = flat.shape[0]
    for lanes in _LANE_WIDTHS:
        if total % lanes == 0:
            return flat.reshape(total // lanes, lanes)
    if x.ndim >= 2:
        return x.reshape(-1, x.shape[-1])
    return flat.reshape(1, total)


# --------------------------------------------------------------------------
# Kernel 1: attention entropy (full reduction to a scalar)
# --------------------------------------------------------------------------
def _attn_entropy_kernel(attn_ref, out_ref, acc_ref, *, n_rows, scale, needs_mask):
    """Accumulates sum(attn * log(attn + 1e-8)) over row tiles; scales at the end."""
    step = pl.program_id(0)

    @pl.when(step == 0)
    def _():
        acc_ref[...] = jnp.zeros_like(acc_ref)

    p = attn_ref[...]                                  # (rt, S)
    if needs_mask:
        rt = attn_ref.shape[0]
        row_ids = step * rt + jax.lax.broadcasted_iota(jnp.int32, p.shape, 0)
        valid = row_ids < n_rows
        p = jnp.where(valid, p, 1.0)                   # keep log() well-defined
        contrib = jnp.where(valid, p * jnp.log(p + 1e-8), 0.0)
    else:
        contrib = p * jnp.log(p + 1e-8)

    # Sublane (row) reduce only; defer the cross-lane XLU reduce to the last step.
    acc_ref[...] += jnp.sum(contrib, axis=0, keepdims=True)

    @pl.when(step == pl.num_programs(0) - 1)
    def _():
        out_ref[...] = (jnp.sum(acc_ref[...], axis=1, keepdims=True)
                        * jnp.float32(scale))


def attention_entropy(attention_weights, *, row_tile=None):
    """torch.sum(aw * log(aw + 1e-8), dim=1).mean() as a (1, 1) f32 array."""
    attn = jnp.asarray(attention_weights, jnp.float32)
    assert attn.ndim >= 2, "attention_weights must have a dim=1 to sum over"
    divisor = attn.size // attn.shape[1]     # number of terms .mean() averages over

    # Full reduction over all elements -> any row-major reshape is exact.
    attn2d = _to_2d(attn)
    n_rows, n_cols = attn2d.shape

    rt = _pick_row_tile(n_rows, n_cols, row_tile)
    grid = (pl.cdiv(n_rows, rt),)
    needs_mask = (n_rows % rt) != 0

    kernel = functools.partial(
        _attn_entropy_kernel,
        n_rows=n_rows,
        scale=1.0 / float(divisor),
        needs_mask=needs_mask,
    )
    return pl.pallas_call(
        kernel,
        out_shape=jax.ShapeDtypeStruct((1, 1), jnp.float32),
        grid_spec=pltpu.PrefetchScalarGridSpec(
            num_scalar_prefetch=0,
            grid=grid,
            in_specs=[pl.BlockSpec((rt, n_cols), lambda i: (i, 0))],
            out_specs=pl.BlockSpec((1, 1), lambda i: (0, 0)),
            scratch_shapes=[pltpu.VMEM((1, n_cols), jnp.float32)],
        ),
        compiler_params=pltpu.CompilerParams(
            dimension_semantics=("arbitrary",)),
    )(attn2d)


# --------------------------------------------------------------------------
# Kernel 2: elementwise BCE-with-logits + alpha * entropy
# --------------------------------------------------------------------------
def _bce_plus_scalar_kernel(ent_ref, logits_ref, labels_ref, out_ref, *, alpha):
    x = logits_ref[...]
    y = labels_ref[...]
    # Numerically stable BCE-with-logits: max(x,0) - x*y + log1p(exp(-|x|)).
    bce = jnp.maximum(x, 0.0) - x * y + jnp.log1p(jnp.exp(-jnp.abs(x)))
    out_ref[...] = bce + jnp.float32(alpha) * ent_ref[...]   # (1,1) broadcast


def ce_attention_entropy_loss(logits, labels, attention_weights, alpha=0.1,
                              *, row_tile=None):
    """Pallas TPU implementation of CEAttentionEntropyLoss.forward."""
    logits = jnp.asarray(logits, jnp.float32)
    labels = jnp.asarray(labels, jnp.float32)
    assert logits.shape == labels.shape
    orig_shape = logits.shape

    # Elementwise op -> lane-dense reshape is exact; reshape back at the end.
    logits2d = _to_2d(logits)
    labels2d = _to_2d(labels)
    n_rows, n_cols = logits2d.shape

    rt = _pick_row_tile(n_rows, n_cols, row_tile)
    grid = (pl.cdiv(n_rows, rt),)

    ent = attention_entropy(attention_weights, row_tile=row_tile)   # (1, 1) f32

    tile_spec = pl.BlockSpec((rt, n_cols), lambda i: (i, 0))
    out2d = pl.pallas_call(
        functools.partial(_bce_plus_scalar_kernel, alpha=float(alpha)),
        out_shape=jax.ShapeDtypeStruct((n_rows, n_cols), jnp.float32),
        grid_spec=pltpu.PrefetchScalarGridSpec(
            num_scalar_prefetch=0,
            grid=grid,
            in_specs=[pl.BlockSpec((1, 1), lambda i: (0, 0)),   # entropy scalar
                      tile_spec, tile_spec],
            out_specs=tile_spec,
        ),
        compiler_params=pltpu.CompilerParams(
            dimension_semantics=("parallel",)),
    )(ent, logits2d, labels2d)
    return out2d.reshape(orig_shape)


# --------------------------------------------------------------------------
# Pure-JAX reference + test
# --------------------------------------------------------------------------
def _reference(logits, labels, attn, alpha=0.1):
    ce = (jnp.maximum(logits, 0.0) - logits * labels
          + jnp.log1p(jnp.exp(-jnp.abs(logits))))
    ent = jnp.mean(jnp.sum(attn * jnp.log(attn + 1e-8), axis=1))
    return ce + alpha * ent


def _check(logits, labels, attn, alpha, row_tile=None):
    out = ce_attention_entropy_loss(logits, labels, attn, alpha=alpha,
                                    row_tile=row_tile)
    out = jax.block_until_ready(out)
    ref = _reference(logits, labels, attn, alpha=alpha)
    assert out.shape == ref.shape, (out.shape, ref.shape)
    assert jnp.allclose(out, ref, rtol=1e-5, atol=1e-5), (out, ref)


if __name__ == "__main__":
    key = jax.random.PRNGKey(0)
    k1, k2, k3, k4, k5, k6, k7, k8, k9 = jax.random.split(key, 9)

    # Test 1: lane-dense reshape path (totals divisible by 128), single grid step.
    batch, n_classes, seq = 8, 32, 64
    logits = jax.random.normal(k1, (batch, n_classes), dtype=jnp.float32) * 2.0
    labels = (jax.random.uniform(k2, (batch, n_classes)) > 0.5).astype(jnp.float32)
    attn = jax.nn.softmax(
        jax.random.normal(k3, (batch, seq), dtype=jnp.float32), axis=-1)
    _check(logits, labels, attn, alpha=0.1)

    # Test 2: fallback natural-layout path (odd sizes, full-extent blocks).
    logits = jax.random.normal(k4, (5, 33), dtype=jnp.float32) * 2.0
    labels = (jax.random.uniform(k5, (5, 33)) > 0.5).astype(jnp.float32)
    attn = jax.nn.softmax(jax.random.normal(k6, (5, 19), dtype=jnp.float32), axis=-1)
    _check(logits, labels, attn, alpha=0.25)

    # Test 3: multi-step grid with ragged row tail (masked entropy accumulation,
    # boundary output writeback) via a forced small row tile.
    logits = jax.random.normal(k7, (20, 16), dtype=jnp.float32) * 2.0
    labels = (jax.random.uniform(k8, (20, 16)) > 0.5).astype(jnp.float32)
    attn = jax.nn.softmax(jax.random.normal(k9, (20, 24), dtype=jnp.float32), axis=-1)
    _check(logits, labels, attn, alpha=0.1, row_tile=8)

    print("KERNEL_OK")
</pallas_src>

<mosaic_0001>
module attributes {stable_mosaic.version = 11 : i64} {
  func.func @_attn_entropy_kernel(%arg0: i32, %arg1: memref<1x512xf32, #tpu.memory_space<vmem>>, %arg2: memref<1x1xf32, #tpu.memory_space<vmem>>, %arg3: memref<1x512xf32, #tpu.memory_space<vmem>>) attributes {dimension_semantics = [#tpu.dimension_semantics<arbitrary>], iteration_bounds = array<i64: 1>, scalar_prefetch = 0 : i64, scratch_operands = 1 : i64, tpu.core_type = #tpu.core_type<tc>, window_params = [{transform_indices = @transform_0, window_bounds = array<i64: 1, 512>}, {pipeline_mode = #tpu.pipeline_mode<synchronous>, transform_indices = @transform_1, window_bounds = array<i64: 1, 1>}]} {
    %c0_i32 = arith.constant 0 : i32
    %0 = arith.cmpi eq, %arg0, %c0_i32 : i32
    %1 = arith.extui %0 : i1 to i32
    %c0_i32_0 = arith.constant 0 : i32
    %2 = arith.cmpi ne, %1, %c0_i32_0 : i32
    scf.if %2 {
      %cst_9 = arith.constant 0.000000e+00 : f32
      %16 = vector.broadcast %cst_9 : f32 to vector<1x512xf32>
      %c0_10 = arith.constant 0 : index
      %c0_11 = arith.constant 0 : index
      %17 = vector.load %arg3[%c0_10, %c0_11] : memref<1x512xf32, #tpu.memory_space<vmem>>, vector<1x512xf32>
      tpu.vector_store %arg3[%c0_10, %c0_11], %16 {strides = array<i32>} : memref<1x512xf32, #tpu.memory_space<vmem>>, vector<1x512xf32>,
    } else {
    }
    %c0 = arith.constant 0 : index
    %c0_1 = arith.constant 0 : index
    %3 = vector.load %arg1[%c0, %c0_1] : memref<1x512xf32, #tpu.memory_space<vmem>>, vector<1x512xf32>
    %cst = arith.constant 9.99999993E-9 : f32
    %4 = vector.broadcast %cst : f32 to vector<1x512xf32>
    %5 = arith.addf %3, %4 : vector<1x512xf32>
    %6 = math.log %5 : vector<1x512xf32>
    %7 = arith.mulf %3, %6 : vector<1x512xf32>
    %c0_2 = arith.constant 0 : index
    %c0_3 = arith.constant 0 : index
    %8 = vector.load %arg3[%c0_2, %c0_3] : memref<1x512xf32, #tpu.memory_space<vmem>>, vector<1x512xf32>
    %cst_4 = arith.constant dense<0.000000e+00> : vector<512xf32>
    %9 = vector.multi_reduction <add>, %7, %cst_4 [0] : vector<1x512xf32> to vector<512xf32>
    %10 = vector.shape_cast %9 : vector<512xf32> to vector<1x512xf32>
    %11 = arith.addf %8, %10 : vector<1x512xf32>
    %c0_5 = arith.constant 0 : index
    %c0_6 = arith.constant 0 : index
    %12 = vector.load %arg3[%c0_5, %c0_6] : memref<1x512xf32, #tpu.memory_space<vmem>>, vector<1x512xf32>
    tpu.vector_store %arg3[%c0_5, %c0_6], %11 {strides = array<i32>} : memref<1x512xf32, #tpu.memory_space<vmem>>, vector<1x512xf32>,
    %c0_i32_7 = arith.constant 0 : i32
    %13 = arith.cmpi eq, %arg0, %c0_i32_7 : i32
    %14 = arith.extui %13 : i1 to i32
    %c0_i32_8 = arith.constant 0 : i32
    %15 = arith.cmpi ne, %14, %c0_i32_8 : i32
    scf.if %15 {
      %c0_9 = arith.constant 0 : index
      %c0_10 = arith.constant 0 : index
      %16 = vector.load %arg3[%c0_9, %c0_10] : memref<1x512xf32, #tpu.memory_space<vmem>>, vector<1x512xf32>
      %cst_11 = arith.constant dense<0.000000e+00> : vector<1xf32>
      %17 = vector.multi_reduction <add>, %16, %cst_11 [1] : vector<1x512xf32> to vector<1xf32>
      %18 = vector.shape_cast %17 : vector<1xf32> to vector<1x1xf32>
      %cst_12 = arith.constant 1.250000e-01 : f32
      %19 = vector.broadcast %cst_12 : f32 to vector<1x1xf32>
      %20 = arith.mulf %18, %19 : vector<1x1xf32>
      %c0_13 = arith.constant 0 : index
      %c0_14 = arith.constant 0 : index
      %21 = vector.load %arg2[%c0_13, %c0_14] : memref<1x1xf32, #tpu.memory_space<vmem>>, vector<1x1xf32>
      tpu.vector_store %arg2[%c0_13, %c0_14], %20 {strides = array<i32>} : memref<1x1xf32, #tpu.memory_space<vmem>>, vector<1x1xf32>,
    } else {
    }
    return
  }
  func.func @transform_0(%arg0: i32) -> (i32, i32) {
    %c0_i32 = arith.constant 0 : i32
    %c0_i32_0 = arith.constant 0 : i32
    return %arg0, %c0_i32 : i32, i32
  }
  func.func @transform_1(%arg0: i32) -> (i32, i32) {
    %c0_i32 = arith.constant 0 : i32
    %c0_i32_0 = arith.constant 0 : i32
    %c0_i32_1 = arith.constant 0 : i32
    return %c0_i32, %c0_i32_0 : i32, i32
  }
}

</mosaic_0001>

<llo_original>
// kernel: tpu_custom_call.1
$region0: #{tpu_custom_call.1}
  #allocation0 [shape = 'u32[]', space=smem, size = 0x4, offset = 0x4, fixed_abs, tag = 'smem constant byte address 0x4 - core index']
  #allocation1 [shape = 'u32[144,128]{1,0:T(1,128)}', space=vmem, size = 0x12000, scoped, tag = 'internal scratch']
  #allocation2 [shape = 'f32[1,512]{1,0:T(1,128)}', space=vmem, size = 0x800, scoped, tag = 'scratch operand']
  %s0 = inlined_call_operand.hbm [shape: f32[1,512], index: 0, kind: input, shape index: {}]
  %s1 = inlined_call_operand.hbm [shape: f32[1,1], index: 1, kind: output, shape index: {}]
  %s2 = sld [smem:[#allocation0]]
  $region26: #{tpu_custom_call.1} parent=0
    _
  %s4 = ssub.s32 1, %s2
  %s5 = scalar_select 0, %s4, %s2
  $region1: #{tpu_custom_call.1} parent=0
    #allocation3 [shape = 'u8[2048]{0}', space=vmem, size = 0x800, scoped, tag = 'input window, operand 0, single buffered']
    #allocation4 [shape = 's32[1]{0}', space=sflag, size = 0x4, scoped, tag = 'scoped memory for tpu_custom_call.1']
    #allocation5 [shape = 's32[1]{0}', space=sflag, size = 0x4, scoped, tag = 'scoped memory for tpu_custom_call.1']
    #allocation6 [shape = 'u8[512]{0}', space=vmem, size = 0x400, scoped, tag = 'output window, operand 0, single buffered']
    %6 = vsyncpa [#allocation4], 0
    %7 = vsyncpa [#allocation5], 0
    // Predicated region
    $region2: #{tpu_custom_call.1} parent=1 // pred_check
      _
    $region3: #{tpu_custom_call.1} parent=1 // pred_check_branch
      %9 = sbr.rel (0) target = $region5
    $region4: #{tpu_custom_call.1} parent=1 // pred_region
      %s11 = ssub.s32 64, 64
      %12 = vsyncadd [#allocation4], %s11
      %s14 = sshll.u32 [#allocation3], 4
      %s15 = int_to_ptr.vmem [resolvable:$true] %s14
      %17 = dma.hbm_to_vmem [thread:$0]  %s0, 64, %s15, [#allocation4]
    $region5: #{tpu_custom_call.1} parent=1 // pred_fallthru
      _
    // Predicated region
    $region6: #{tpu_custom_call.1} parent=1 // pred_check
      _
    $region7: #{tpu_custom_call.1} parent=1 // pred_check_branch
      %19 = sbr.rel (0) target = $region9
    $region8: #{tpu_custom_call.1} parent=1 // pred_region
      %20 = dma.done [#allocation4], 64
    $region9: #{tpu_custom_call.1} parent=1 // pred_fallthru
      _
    %p21 = scmp.eq.s32.totalorder 0, 0
    // Predicated region
    $region10: #{tpu_custom_call.1} parent=1 // pred_check
      %p22 = pneg %p21
    $region11: #{tpu_custom_call.1} parent=1 // pred_check_branch
      %24 = sbr.rel (%p22) target = $region13
    $region12: #{tpu_custom_call.1} parent=1 // pred_region
      %v25 = vlaneseq
      %vm26 = vcmp.ge.s32.totalorder %v25, 0
      %vm27 = vcmp.lt.s32.totalorder %v25, 512
      %vm28 = vmand %vm26, %vm27
      %29 = vst.msk [vmem:[#allocation2] sm:$0xf] %vm28, 0.0
    $region13: #{tpu_custom_call.1} parent=1 // pred_fallthru
      _
    %v30 = vld [vmem:[#allocation3] sm:$0xf]
    %v31 = vadd.f32 %v30, 1e-08
    %v32 = vlog2.pop %v31
    %v33 = vmul.f32 %v32, 0.6931472
    %v34 = vmul.f32 %v30, %v33
    %v35 = vld [vmem:[#allocation2] sm:$0xf]
    %v36 = vadd.f32 %v34, 0.0
    %v37 = vadd.f32 %v35, %v36
    %v38 = vlaneseq
    %vm39 = vcmp.ge.s32.totalorder %v38, 0
    %vm40 = vcmp.lt.s32.totalorder %v38, 512
    %vm41 = vmand %vm39, %vm40
    %42 = vst.msk [vmem:[#allocation2] sm:$0xf] %vm41, %v37
    // Predicated region
    $region14: #{tpu_custom_call.1} parent=1 // pred_check
      %p43 = pneg %p21
    $region15: #{tpu_custom_call.1} parent=1 // pred_check_branch
      %45 = sbr.rel (%p43) target = $region17
    $region16: #{tpu_custom_call.1} parent=1 // pred_region
      %v46 = vld [vmem:[#allocation2] sm:$0xf]
      %v48 = vlaneseq
      %v49 = vshrl.u32 %v48, 7
      %v50 = vsub.s32 0, %v49
      %v51 = vrot.slane %v46, %v50
      %v52 = vlaneseq
      %v53 = vshrl.u32 %v52, 7
      %v54 = vsub.s32 1, %v53
      %v55 = vrot.slane %v46, %v54
      %v56 = vlaneseq
      %v57 = vshrl.u32 %v56, 7
      %v58 = vsub.s32 2, %v57
      %v59 = vrot.slane %v46, %v58
      %v60 = vlaneseq
      %v61 = vshrl.u32 %v60, 7
      %v62 = vsub.s32 3, %v61
      %v63 = vrot.slane %v46, %v62
      %vm68 = vcmask 1040384
      %v69 = vsel %vm68, %v51, 0.0
      %v70 = vsel %vm68, %v55, 0.0
      %v71 = vadd.f32 %v69, %v70
      %v72 = vsel %vm68, %v59, 0.0
      %v73 = vadd.f32 %v71, %v72
      %v74 = vsel %vm68, %v63, 0.0
      %v75 = vadd.f32 %v73, %v74
      %76 = vadd.xlane.f32.xlu0 %v75
      %v77 = vpop.xlane.xlu0 %76
      %v78 = vmul.f32 %v77, 0.125
      %vm79 = vcmask 0
      %80 = vst.msk [vmem:[#allocation6] sm:$0x1] %vm79, %v78
    $region17: #{tpu_custom_call.1} parent=1 // pred_fallthru
      _
    // Predicated region
    $region18: #{tpu_custom_call.1} parent=1 // pred_check
      _
    $region19: #{tpu_custom_call.1} parent=1 // pred_check_branch
      %82 = sbr.rel (0) target = $region21
    $region20: #{tpu_custom_call.1} parent=1 // pred_region
      %s84 = ssub.s32 16, 16
      %85 = vsyncadd [#allocation5], %s84
      %s87 = sshll.u32 [#allocation6], 4
      %s88 = int_to_ptr.vmem [resolvable:$true] %s87
      %90 = dma.vmem_to_hbm [thread:$0]  %s88, 16, %s1, [#allocation5]
    $region21: #{tpu_custom_call.1} parent=1 // pred_fallthru
      _
    // Predicated region
    $region22: #{tpu_custom_call.1} parent=1 // pred_check
      _
    $region23: #{tpu_custom_call.1} parent=1 // pred_check_branch
      %92 = sbr.rel (0) target = $region25
    $region24: #{tpu_custom_call.1} parent=1 // pred_region
      %93 = dma.done [#allocation5], 16
    $region25: #{tpu_custom_call.1} parent=1 // pred_fallthru
      _
    %94 = vsyncpa [#allocation4], 1
    %95 = vsyncpa [#allocation5], 1

</llo_original>
